<compile_context>
chip_gen: v7x
topology: tpu7x:2x2x1
jax: 0.10.0
libtpu: 0.0.40
codegen_flags: <defaults>
</compile_context>

<pallas_src>
import jax
import jax.numpy as jnp
from jax.experimental import pallas as pl
from jax.experimental.pallas import tpu as pltpu


def _elman_kernel(x_ref, w1x_ref, w1h_ref, b1_ref, w2_ref, b2_ref,
                  out_ref, hlast_ref, hall_ref):
    tb, _ = x_ref.shape          # T*B, E   (t-major flattening: row = t*B + b)
    b, h = hlast_ref.shape       # B, H
    t = tb // b

    # ---- Hoisted input projection: one (T*B, E) @ (E, H) matmul, bias once.
    xw = (jnp.dot(x_ref[...], w1x_ref[...],
                  preferred_element_type=jnp.float32)
          + b1_ref[...])                                   # (T*B, H)

    w1h = w1h_ref[...]                                     # (H, H), loaded once

    # ---- Serial recurrence: only relu(xw[t] + h @ W1_h) on the critical path.
    hid = jnp.zeros((b, h), dtype=jnp.float32)
    for step in range(t):                                  # static full unroll
        r0 = step * b
        pre = xw[r0:r0 + b, :] + jnp.dot(
            hid, w1h, preferred_element_type=jnp.float32)
        hid = jnp.maximum(pre, 0.0)
        hall_ref[r0:r0 + b, :] = hid                       # stash hidden state

    hlast_ref[...] = hid                                   # final hidden, once

    # ---- Hoisted output projection: single (T*B, H) @ (H, O) matmul + b2.
    out_ref[...] = (jnp.dot(hall_ref[...], w2_ref[...],
                            preferred_element_type=jnp.float32)
                    + b2_ref[...])


def elman_forward(x, w1, b1, w2, b2):
    """x: (B, T, E) float32.  w1: (H, E+H), b1: (H,), w2: (O, H), b2: (O,)."""
    b, t, e = x.shape
    hsize = w1.shape[0]
    outsize = w2.shape[0]
    assert w1.shape[1] == e + hsize  # PyTorch module requires e == hsize anyway

    # Pre-transpose params to (in, out) so the kernel does plain x @ W.
    w1x = jnp.transpose(w1[:, :e])       # (E, H)
    w1h = jnp.transpose(w1[:, e:])       # (H, H)
    w2t = jnp.transpose(w2)              # (H, O)
    b1r = b1.reshape(1, hsize)
    b2r = b2.reshape(1, outsize)

    # t-major flattening: row index = t * B + b.
    x_flat = jnp.transpose(x, (1, 0, 2)).reshape(t * b, e)

    out_flat, h_last = pl.pallas_call(
        _elman_kernel,
        out_shape=(
            jax.ShapeDtypeStruct((t * b, outsize), jnp.float32),
            jax.ShapeDtypeStruct((b, hsize), jnp.float32),
        ),
        grid_spec=pltpu.PrefetchScalarGridSpec(
            num_scalar_prefetch=0,
            grid=(1,),  # single invocation; timestep loop is inside the body
            in_specs=[
                pl.BlockSpec((t * b, e), lambda i: (0, 0)),        # x (flat)
                pl.BlockSpec((e, hsize), lambda i: (0, 0)),        # W1_x
                pl.BlockSpec((hsize, hsize), lambda i: (0, 0)),    # W1_h
                pl.BlockSpec((1, hsize), lambda i: (0, 0)),        # b1
                pl.BlockSpec((hsize, outsize), lambda i: (0, 0)),  # W2
                pl.BlockSpec((1, outsize), lambda i: (0, 0)),      # b2
            ],
            out_specs=[
                pl.BlockSpec((t * b, outsize), lambda i: (0, 0)),  # outs (flat)
                pl.BlockSpec((b, hsize), lambda i: (0, 0)),        # hidden
            ],
            scratch_shapes=[pltpu.VMEM((t * b, hsize), jnp.float32)],
        ),
        compiler_params=pltpu.CompilerParams(
            dimension_semantics=("arbitrary",),
        ),
    )(x_flat, w1x, w1h, b1r, w2t, b2r)

    outs = out_flat.reshape(t, b, outsize).transpose(1, 0, 2)  # (B, T, O)
    return outs, h_last


def elman_reference(x, w1, b1, w2, b2):
    """Pure-JAX reference matching the PyTorch forward."""
    b, t, e = x.shape
    hsize = w1.shape[0]
    hidden = jnp.zeros((b, hsize), jnp.float32)
    outs = []
    for i in range(t):
        inp = jnp.concatenate([x[:, i, :], hidden], axis=1)
        hidden = jax.nn.relu(inp @ w1.T + b1)
        outs.append((hidden @ w2.T + b2)[:, None, :])
    return jnp.concatenate(outs, axis=1), hidden


if __name__ == "__main__":
    B, T = 2, 8
    INSIZE = OUTSIZE = HSIZE = 32

    key = jax.random.PRNGKey(0)
    kx, k1, k2, k3, k4 = jax.random.split(key, 5)

    x = jax.random.normal(kx, (B, T, INSIZE), dtype=jnp.float32)
    # Deterministic param init (shapes follow nn.Linear(insize+hsize, hsize) etc.)
    w1 = jax.random.normal(k1, (HSIZE, INSIZE + HSIZE), dtype=jnp.float32) * 0.1
    b1 = jax.random.normal(k2, (HSIZE,), dtype=jnp.float32) * 0.1
    w2 = jax.random.normal(k3, (OUTSIZE, HSIZE), dtype=jnp.float32) * 0.1
    b2 = jax.random.normal(k4, (OUTSIZE,), dtype=jnp.float32) * 0.1

    outs, h_last = elman_forward(x, w1, b1, w2, b2)
    jax.block_until_ready((outs, h_last))

    ref_outs, ref_h = elman_reference(x, w1, b1, w2, b2)
    assert outs.shape == (B, T, OUTSIZE) and h_last.shape == (B, HSIZE)
    assert jnp.allclose(outs, ref_outs, atol=1e-5, rtol=1e-5)
    assert jnp.allclose(h_last, ref_h, atol=1e-5, rtol=1e-5)

    print("KERNEL_OK")
</pallas_src>

<mosaic_0001>
module attributes {stable_mosaic.version = 11 : i64} {
  func.func @_elman_kernel(%arg0: i32, %arg1: memref<16x32xf32, #tpu.memory_space<vmem>>, %arg2: memref<32x32xf32, #tpu.memory_space<vmem>>, %arg3: memref<32x32xf32, #tpu.memory_space<vmem>>, %arg4: memref<1x32xf32, #tpu.memory_space<vmem>>, %arg5: memref<32x32xf32, #tpu.memory_space<vmem>>, %arg6: memref<1x32xf32, #tpu.memory_space<vmem>>, %arg7: memref<16x32xf32, #tpu.memory_space<vmem>>, %arg8: memref<2x32xf32, #tpu.memory_space<vmem>>, %arg9: memref<16x32xf32, #tpu.memory_space<vmem>>) attributes {dimension_semantics = [#tpu.dimension_semantics<arbitrary>], iteration_bounds = array<i64: 1>, scalar_prefetch = 0 : i64, scratch_operands = 1 : i64, tpu.core_type = #tpu.core_type<tc>, window_params = [{pipeline_mode = #tpu.pipeline_mode<synchronous>, transform_indices = @transform_0, window_bounds = array<i64: 16, 32>}, {pipeline_mode = #tpu.pipeline_mode<synchronous>, transform_indices = @transform_1, window_bounds = array<i64: 32, 32>}, {pipeline_mode = #tpu.pipeline_mode<synchronous>, transform_indices = @transform_2, window_bounds = array<i64: 32, 32>}, {pipeline_mode = #tpu.pipeline_mode<synchronous>, transform_indices = @transform_3, window_bounds = array<i64: 1, 32>}, {pipeline_mode = #tpu.pipeline_mode<synchronous>, transform_indices = @transform_4, window_bounds = array<i64: 32, 32>}, {pipeline_mode = #tpu.pipeline_mode<synchronous>, transform_indices = @transform_5, window_bounds = array<i64: 1, 32>}, {pipeline_mode = #tpu.pipeline_mode<synchronous>, transform_indices = @transform_6, window_bounds = array<i64: 16, 32>}, {pipeline_mode = #tpu.pipeline_mode<synchronous>, transform_indices = @transform_7, window_bounds = array<i64: 2, 32>}]} {
    %c0 = arith.constant 0 : index
    %c0_0 = arith.constant 0 : index
    %0 = vector.load %arg1[%c0, %c0_0] : memref<16x32xf32, #tpu.memory_space<vmem>>, vector<16x32xf32>
    %c0_1 = arith.constant 0 : index
    %c0_2 = arith.constant 0 : index
    %1 = vector.load %arg2[%c0_1, %c0_2] : memref<32x32xf32, #tpu.memory_space<vmem>>, vector<32x32xf32>
    %cst = arith.constant dense<0.000000e+00> : vector<16x32xf32>
    %2 = tpu.matmul %0, %1, %cst {dimension_numbers = #tpu.dot_dimension_numbers<[1], [0], [0], [1], [0, 0, 1, 1], [], []>} : vector<16x32xf32>, vector<32x32xf32>, vector<16x32xf32> -> vector<16x32xf32>
    %c0_3 = arith.constant 0 : index
    %c0_4 = arith.constant 0 : index
    %3 = vector.load %arg4[%c0_3, %c0_4] : memref<1x32xf32, #tpu.memory_space<vmem>>, vector<1x32xf32>
    %4 = vector.broadcast %3 : vector<1x32xf32> to vector<16x32xf32>
    %5 = arith.addf %2, %4 : vector<16x32xf32>
    %c0_5 = arith.constant 0 : index
    %c0_6 = arith.constant 0 : index
    %6 = vector.load %arg3[%c0_5, %c0_6] : memref<32x32xf32, #tpu.memory_space<vmem>>, vector<32x32xf32>
    %cst_7 = arith.constant 0.000000e+00 : f32
    %7 = vector.broadcast %cst_7 : f32 to vector<2x32xf32>
    %8 = vector.extract_strided_slice %5 {offsets = [0, 0], sizes = [2, 32], strides = [1, 1]} : vector<16x32xf32> to vector<2x32xf32>
    %cst_8 = arith.constant dense<0.000000e+00> : vector<2x32xf32>
    %9 = tpu.matmul %7, %6, %cst_8 {dimension_numbers = #tpu.dot_dimension_numbers<[1], [0], [0], [1], [0, 0, 1, 1], [], []>} : vector<2x32xf32>, vector<32x32xf32>, vector<2x32xf32> -> vector<2x32xf32>
    %10 = arith.addf %8, %9 : vector<2x32xf32>
    %cst_9 = arith.constant 0.000000e+00 : f32
    %11 = vector.broadcast %cst_9 : f32 to vector<2x32xf32>
    %12 = arith.maximumf %10, %11 : vector<2x32xf32>
    %c0_10 = arith.constant 0 : index
    %c0_11 = arith.constant 0 : index
    %13 = vector.load %arg9[%c0_10, %c0_11] : memref<16x32xf32, #tpu.memory_space<vmem>>, vector<2x32xf32>
    tpu.vector_store %arg9[%c0_10, %c0_11], %12 {strides = array<i32>} : memref<16x32xf32, #tpu.memory_space<vmem>>, vector<2x32xf32>,
    %14 = vector.extract_strided_slice %5 {offsets = [2, 0], sizes = [2, 32], strides = [1, 1]} : vector<16x32xf32> to vector<2x32xf32>
    %cst_12 = arith.constant dense<0.000000e+00> : vector<2x32xf32>
    %15 = tpu.matmul %12, %6, %cst_12 {dimension_numbers = #tpu.dot_dimension_numbers<[1], [0], [0], [1], [0, 0, 1, 1], [], []>} : vector<2x32xf32>, vector<32x32xf32>, vector<2x32xf32> -> vector<2x32xf32>
    %16 = arith.addf %14, %15 : vector<2x32xf32>
    %cst_13 = arith.constant 0.000000e+00 : f32
    %17 = vector.broadcast %cst_13 : f32 to vector<2x32xf32>
    %18 = arith.maximumf %16, %17 : vector<2x32xf32>
    %c2 = arith.constant 2 : index
    %c0_14 = arith.constant 0 : index
    %19 = vector.load %arg9[%c2, %c0_14] : memref<16x32xf32, #tpu.memory_space<vmem>>, vector<2x32xf32>
    tpu.vector_store %arg9[%c2, %c0_14], %18 {strides = array<i32>} : memref<16x32xf32, #tpu.memory_space<vmem>>, vector<2x32xf32>,
    %20 = vector.extract_strided_slice %5 {offsets = [4, 0], sizes = [2, 32], strides = [1, 1]} : vector<16x32xf32> to vector<2x32xf32>
    %cst_15 = arith.constant dense<0.000000e+00> : vector<2x32xf32>
    %21 = tpu.matmul %18, %6, %cst_15 {dimension_numbers = #tpu.dot_dimension_numbers<[1], [0], [0], [1], [0, 0, 1, 1], [], []>} : vector<2x32xf32>, vector<32x32xf32>, vector<2x32xf32> -> vector<2x32xf32>
    %22 = arith.addf %20, %21 : vector<2x32xf32>
    %cst_16 = arith.constant 0.000000e+00 : f32
    %23 = vector.broadcast %cst_16 : f32 to vector<2x32xf32>
    %24 = arith.maximumf %22, %23 : vector<2x32xf32>
    %c4 = arith.constant 4 : index
    %c0_17 = arith.constant 0 : index
    %25 = vector.load %arg9[%c4, %c0_17] : memref<16x32xf32, #tpu.memory_space<vmem>>, vector<2x32xf32>
    tpu.vector_store %arg9[%c4, %c0_17], %24 {strides = array<i32>} : memref<16x32xf32, #tpu.memory_space<vmem>>, vector<2x32xf32>,
    %26 = vector.extract_strided_slice %5 {offsets = [6, 0], sizes = [2, 32], strides = [1, 1]} : vector<16x32xf32> to vector<2x32xf32>
    %cst_18 = arith.constant dense<0.000000e+00> : vector<2x32xf32>
    %27 = tpu.matmul %24, %6, %cst_18 {dimension_numbers = #tpu.dot_dimension_numbers<[1], [0], [0], [1], [0, 0, 1, 1], [], []>} : vector<2x32xf32>, vector<32x32xf32>, vector<2x32xf32> -> vector<2x32xf32>
    %28 = arith.addf %26, %27 : vector<2x32xf32>
    %cst_19 = arith.constant 0.000000e+00 : f32
    %29 = vector.broadcast %cst_19 : f32 to vector<2x32xf32>
    %30 = arith.maximumf %28, %29 : vector<2x32xf32>
    %c6 = arith.constant 6 : index
    %c0_20 = arith.constant 0 : index
    %31 = vector.load %arg9[%c6, %c0_20] : memref<16x32xf32, #tpu.memory_space<vmem>>, vector<2x32xf32>
    tpu.vector_store %arg9[%c6, %c0_20], %30 {strides = array<i32>} : memref<16x32xf32, #tpu.memory_space<vmem>>, vector<2x32xf32>,
    %32 = vector.extract_strided_slice %5 {offsets = [8, 0], sizes = [2, 32], strides = [1, 1]} : vector<16x32xf32> to vector<2x32xf32>
    %cst_21 = arith.constant dense<0.000000e+00> : vector<2x32xf32>
    %33 = tpu.matmul %30, %6, %cst_21 {dimension_numbers = #tpu.dot_dimension_numbers<[1], [0], [0], [1], [0, 0, 1, 1], [], []>} : vector<2x32xf32>, vector<32x32xf32>, vector<2x32xf32> -> vector<2x32xf32>
    %34 = arith.addf %32, %33 : vector<2x32xf32>
    %cst_22 = arith.constant 0.000000e+00 : f32
    %35 = vector.broadcast %cst_22 : f32 to vector<2x32xf32>
    %36 = arith.maximumf %34, %35 : vector<2x32xf32>
    %c8 = arith.constant 8 : index
    %c0_23 = arith.constant 0 : index
    %37 = vector.load %arg9[%c8, %c0_23] : memref<16x32xf32, #tpu.memory_space<vmem>>, vector<2x32xf32>
    tpu.vector_store %arg9[%c8, %c0_23], %36 {strides = array<i32>} : memref<16x32xf32, #tpu.memory_space<vmem>>, vector<2x32xf32>,
    %38 = vector.extract_strided_slice %5 {offsets = [10, 0], sizes = [2, 32], strides = [1, 1]} : vector<16x32xf32> to vector<2x32xf32>
    %cst_24 = arith.constant dense<0.000000e+00> : vector<2x32xf32>
    %39 = tpu.matmul %36, %6, %cst_24 {dimension_numbers = #tpu.dot_dimension_numbers<[1], [0], [0], [1], [0, 0, 1, 1], [], []>} : vector<2x32xf32>, vector<32x32xf32>, vector<2x32xf32> -> vector<2x32xf32>
    %40 = arith.addf %38, %39 : vector<2x32xf32>
    %cst_25 = arith.constant 0.000000e+00 : f32
    %41 = vector.broadcast %cst_25 : f32 to vector<2x32xf32>
    %42 = arith.maximumf %40, %41 : vector<2x32xf32>
    %c10 = arith.constant 10 : index
    %c0_26 = arith.constant 0 : index
    %43 = vector.load %arg9[%c10, %c0_26] : memref<16x32xf32, #tpu.memory_space<vmem>>, vector<2x32xf32>
    tpu.vector_store %arg9[%c10, %c0_26], %42 {strides = array<i32>} : memref<16x32xf32, #tpu.memory_space<vmem>>, vector<2x32xf32>,
    %44 = vector.extract_strided_slice %5 {offsets = [12, 0], sizes = [2, 32], strides = [1, 1]} : vector<16x32xf32> to vector<2x32xf32>
    %cst_27 = arith.constant dense<0.000000e+00> : vector<2x32xf32>
    %45 = tpu.matmul %42, %6, %cst_27 {dimension_numbers = #tpu.dot_dimension_numbers<[1], [0], [0], [1], [0, 0, 1, 1], [], []>} : vector<2x32xf32>, vector<32x32xf32>, vector<2x32xf32> -> vector<2x32xf32>
    %46 = arith.addf %44, %45 : vector<2x32xf32>
    %cst_28 = arith.constant 0.000000e+00 : f32
    %47 = vector.broadcast %cst_28 : f32 to vector<2x32xf32>
    %48 = arith.maximumf %46, %47 : vector<2x32xf32>
    %c12 = arith.constant 12 : index
    %c0_29 = arith.constant 0 : index
    %49 = vector.load %arg9[%c12, %c0_29] : memref<16x32xf32, #tpu.memory_space<vmem>>, vector<2x32xf32>
    tpu.vector_store %arg9[%c12, %c0_29], %48 {strides = array<i32>} : memref<16x32xf32, #tpu.memory_space<vmem>>, vector<2x32xf32>,
    %50 = vector.extract_strided_slice %5 {offsets = [14, 0], sizes = [2, 32], strides = [1, 1]} : vector<16x32xf32> to vector<2x32xf32>
    %cst_30 = arith.constant dense<0.000000e+00> : vector<2x32xf32>
    %51 = tpu.matmul %48, %6, %cst_30 {dimension_numbers = #tpu.dot_dimension_numbers<[1], [0], [0], [1], [0, 0, 1, 1], [], []>} : vector<2x32xf32>, vector<32x32xf32>, vector<2x32xf32> -> vector<2x32xf32>
    %52 = arith.addf %50, %51 : vector<2x32xf32>
    %cst_31 = arith.constant 0.000000e+00 : f32
    %53 = vector.broadcast %cst_31 : f32 to vector<2x32xf32>
    %54 = arith.maximumf %52, %53 : vector<2x32xf32>
    %c14 = arith.constant 14 : index
    %c0_32 = arith.constant 0 : index
    %55 = vector.load %arg9[%c14, %c0_32] : memref<16x32xf32, #tpu.memory_space<vmem>>, vector<2x32xf32>
    tpu.vector_store %arg9[%c14, %c0_32], %54 {strides = array<i32>} : memref<16x32xf32, #tpu.memory_space<vmem>>, vector<2x32xf32>,
    %c0_33 = arith.constant 0 : index
    %c0_34 = arith.constant 0 : index
    %56 = vector.load %arg8[%c0_33, %c0_34] : memref<2x32xf32, #tpu.memory_space<vmem>>, vector<2x32xf32>
    tpu.vector_store %arg8[%c0_33, %c0_34], %54 {strides = array<i32>} : memref<2x32xf32, #tpu.memory_space<vmem>>, vector<2x32xf32>,
    %c0_35 = arith.constant 0 : index
    %c0_36 = arith.constant 0 : index
    %57 = vector.load %arg9[%c0_35, %c0_36] : memref<16x32xf32, #tpu.memory_space<vmem>>, vector<16x32xf32>
    %c0_37 = arith.constant 0 : index
    %c0_38 = arith.constant 0 : index
    %58 = vector.load %arg5[%c0_37, %c0_38] : memref<32x32xf32, #tpu.memory_space<vmem>>, vector<32x32xf32>
    %cst_39 = arith.constant dense<0.000000e+00> : vector<16x32xf32>
    %59 = tpu.matmul %57, %58, %cst_39 {dimension_numbers = #tpu.dot_dimension_numbers<[1], [0], [0], [1], [0, 0, 1, 1], [], []>} : vector<16x32xf32>, vector<32x32xf32>, vector<16x32xf32> -> vector<16x32xf32>
    %c0_40 = arith.constant 0 : index
    %c0_41 = arith.constant 0 : index
    %60 = vector.load %arg6[%c0_40, %c0_41] : memref<1x32xf32, #tpu.memory_space<vmem>>, vector<1x32xf32>
    %61 = vector.broadcast %60 : vector<1x32xf32> to vector<16x32xf32>
    %62 = arith.addf %59, %61 : vector<16x32xf32>
    %c0_42 = arith.constant 0 : index
    %c0_43 = arith.constant 0 : index
    %63 = vector.load %arg7[%c0_42, %c0_43] : memref<16x32xf32, #tpu.memory_space<vmem>>, vector<16x32xf32>
    tpu.vector_store %arg7[%c0_42, %c0_43], %62 {strides = array<i32>} : memref<16x32xf32, #tpu.memory_space<vmem>>, vector<16x32xf32>,
    return
  }
  func.func @transform_0(%arg0: i32) -> (i32, i32) {
    %c0_i32 = arith.constant 0 : i32
    %c0_i32_0 = arith.constant 0 : i32
    %c0_i32_1 = arith.constant 0 : i32
    return %c0_i32, %c0_i32_0 : i32, i32
  }
  func.func @transform_1(%arg0: i32) -> (i32, i32) {
    %c0_i32 = arith.constant 0 : i32
    %c0_i32_0 = arith.constant 0 : i32
    %c0_i32_1 = arith.constant 0 : i32
    return %c0_i32, %c0_i32_0 : i32, i32
  }
  func.func @transform_2(%arg0: i32) -> (i32, i32) {
    %c0_i32 = arith.constant 0 : i32
    %c0_i32_0 = arith.constant 0 : i32
    %c0_i32_1 = arith.constant 0 : i32
    return %c0_i32, %c0_i32_0 : i32, i32
  }
  func.func @transform_3(%arg0: i32) -> (i32, i32) {
    %c0_i32 = arith.constant 0 : i32
    %c0_i32_0 = arith.constant 0 : i32
    %c0_i32_1 = arith.constant 0 : i32
    return %c0_i32, %c0_i32_0 : i32, i32
  }
  func.func @transform_4(%arg0: i32) -> (i32, i32) {
    %c0_i32 = arith.constant 0 : i32
    %c0_i32_0 = arith.constant 0 : i32
    %c0_i32_1 = arith.constant 0 : i32
    return %c0_i32, %c0_i32_0 : i32, i32
  }
  func.func @transform_5(%arg0: i32) -> (i32, i32) {
    %c0_i32 = arith.constant 0 : i32
    %c0_i32_0 = arith.constant 0 : i32
    %c0_i32_1 = arith.constant 0 : i32
    return %c0_i32, %c0_i32_0 : i32, i32
  }
  func.func @transform_6(%arg0: i32) -> (i32, i32) {
    %c0_i32 = arith.constant 0 : i32
    %c0_i32_0 = arith.constant 0 : i32
    %c0_i32_1 = arith.constant 0 : i32
    return %c0_i32, %c0_i32_0 : i32, i32
  }
  func.func @transform_7(%arg0: i32) -> (i32, i32) {
    %c0_i32 = arith.constant 0 : i32
    %c0_i32_0 = arith.constant 0 : i32
    %c0_i32_1 = arith.constant 0 : i32
    return %c0_i32, %c0_i32_0 : i32, i32
  }
}

</mosaic_0001>

<llo_original>
// kernel: tpu_custom_call.1
$region0: #{tpu_custom_call.1}
  #allocation0 [shape = 'u32[]', space=smem, size = 0x4, offset = 0x4, fixed_abs, tag = 'smem constant byte address 0x4 - core index']
  #allocation1 [shape = 'u32[144,128]{1,0:T(1,128)}', space=vmem, size = 0x12000, scoped, tag = 'internal scratch']
  #allocation2 [shape = 'f32[16,32]{1,0:T(8,128)}', space=vmem, size = 0x2000, scoped, tag = 'scratch operand']
  %s0 = inlined_call_operand.hbm [shape: f32[16,32], index: 0, kind: input, shape index: {}]
  %s1 = inlined_call_operand.hbm [shape: f32[32,32], index: 1, kind: input, shape index: {}]
  %s2 = inlined_call_operand.hbm [shape: f32[32,32], index: 2, kind: input, shape index: {}]
  %s3 = inlined_call_operand.vmem [shape: f32[1,32], index: 3, kind: input, shape index: {}]
  %s4 = inlined_call_operand.hbm [shape: f32[32,32], index: 4, kind: input, shape index: {}]
  %s5 = inlined_call_operand.vmem [shape: f32[1,32], index: 5, kind: input, shape index: {}]
  %s6 = inlined_call_operand.hbm [shape: f32[16,32], index: 6, kind: output, shape index: {0}]
  %s7 = inlined_call_operand.hbm [shape: f32[2,32], index: 7, kind: output, shape index: {1}]
  %8 = xla_tuple %s6, %s7
  %s9 = sld [smem:[#allocation0]]
  $region58: #{tpu_custom_call.1} parent=0
    _
  %s11 = ssub.s32 1, %s9
  %s12 = scalar_select 0, %s11, %s9
  $region1: #{tpu_custom_call.1} parent=0
    #allocation3 [shape = 'u8[8192]{0}', space=vmem, size = 0x2000, scoped, tag = 'input window, operand 0, single buffered']
    #allocation4 [shape = 's32[1]{0}', space=sflag, size = 0x4, scoped, tag = 'scoped memory for tpu_custom_call.1']
    #allocation5 [shape = 's32[1]{0}', space=sflag, size = 0x4, scoped, tag = 'scoped memory for tpu_custom_call.1']
    #allocation6 [shape = 'u8[16384]{0}', space=vmem, size = 0x4000, scoped, tag = 'input window, operand 1, single buffered']
    #allocation7 [shape = 's32[1]{0}', space=sflag, size = 0x4, scoped, tag = 'scoped memory for tpu_custom_call.1']
    #allocation8 [shape = 'u8[16384]{0}', space=vmem, size = 0x4000, scoped, tag = 'input window, operand 2, single buffered']
    #allocation9 [shape = 'u8[16384]{0}', space=vmem, size = 0x4000, scoped, tag = 'input window, operand 4, single buffered']
    #allocation10 [shape = 's32[1]{0}', space=sflag, size = 0x4, scoped, tag = 'scoped memory for tpu_custom_call.1']
    #allocation11 [shape = 'u8[8192]{0}', space=vmem, size = 0x2000, scoped, tag = 'output window, operand 0, single buffered']
    #allocation12 [shape = 'u8[1024]{0}', space=vmem, size = 0x400, scoped, tag = 'output window, operand 1, single buffered']
    #allocation13 [shape = 's32[1]{0}', space=sflag, size = 0x4, scoped, tag = 'scoped memory for tpu_custom_call.1']
    %13 = vsyncpa [#allocation4], 0
    %14 = vsyncpa [#allocation7], 0
    %15 = vsyncpa [#allocation10], 0
    %16 = vsyncpa [#allocation5], 0
    %17 = vsyncpa [#allocation13], 0
    // Predicated region
    $region2: #{tpu_custom_call.1} parent=1 // pred_check
      _
    $region3: #{tpu_custom_call.1} parent=1 // pred_check_branch
      %19 = sbr.rel (0) target = $region5
    $region4: #{tpu_custom_call.1} parent=1 // pred_region
      %s21 = ssub.s32 256, 256
      %22 = vsyncadd [#allocation4], %s21
      %s23 = sshll.u32 [#allocation3], 4
      %s24 = int_to_ptr.vmem [resolvable:$true] %s23
      %29 = dma.hbm_to_vmem [thread:$0]  %s0, 256, %s24, [#allocation4], 128, 128, 8
    $region5: #{tpu_custom_call.1} parent=1 // pred_fallthru
      _
    // Predicated region
    $region6: #{tpu_custom_call.1} parent=1 // pred_check
      _
    $region7: #{tpu_custom_call.1} parent=1 // pred_check_branch
      %31 = sbr.rel (0) target = $region9
    $region8: #{tpu_custom_call.1} parent=1 // pred_region
      %s33 = ssub.s32 512, 512
      %34 = vsyncadd [#allocation7], %s33
      %s35 = sshll.u32 [#allocation6], 4
      %s36 = int_to_ptr.vmem [resolvable:$true] %s35
      %41 = dma.hbm_to_vmem [thread:$0]  %s1, 512, %s36, [#allocation7], 128, 128, 8
    $region9: #{tpu_custom_call.1} parent=1 // pred_fallthru
      _
    // Predicated region
    $region10: #{tpu_custom_call.1} parent=1 // pred_check
      _
    $region11: #{tpu_custom_call.1} parent=1 // pred_check_branch
      %43 = sbr.rel (0) target = $region13
    $region12: #{tpu_custom_call.1} parent=1 // pred_region
      %s45 = ssub.s32 512, 512
      %46 = vsyncadd [#allocation7], %s45
      %s47 = sshll.u32 [#allocation8], 4
      %s48 = int_to_ptr.vmem [resolvable:$true] %s47
      %53 = dma.hbm_to_vmem [thread:$0]  %s2, 512, %s48, [#allocation7], 128, 128, 8
    $region13: #{tpu_custom_call.1} parent=1 // pred_fallthru
      _
    // Predicated region
    $region14: #{tpu_custom_call.1} parent=1 // pred_check
      _
    $region15: #{tpu_custom_call.1} parent=1 // pred_check_branch
      %55 = sbr.rel (0) target = $region17
    $region16: #{tpu_custom_call.1} parent=1 // pred_region
      _
    $region17: #{tpu_custom_call.1} parent=1 // pred_fallthru
      _
    // Predicated region
    $region18: #{tpu_custom_call.1} parent=1 // pred_check
      _
    $region19: #{tpu_custom_call.1} parent=1 // pred_check_branch
      %57 = sbr.rel (0) target = $region21
    $region20: #{tpu_custom_call.1} parent=1 // pred_region
      %s59 = ssub.s32 512, 512
      %60 = vsyncadd [#allocation10], %s59
      %s61 = sshll.u32 [#allocation9], 4
      %s62 = int_to_ptr.vmem [resolvable:$true] %s61
      %67 = dma.hbm_to_vmem [thread:$0]  %s4, 512, %s62, [#allocation10], 128, 128, 8
    $region21: #{tpu_custom_call.1} parent=1 // pred_fallthru
      _
    // Predicated region
    $region22: #{tpu_custom_call.1} parent=1 // pred_check
      _
    $region23: #{tpu_custom_call.1} parent=1 // pred_check_branch
      %69 = sbr.rel (0) target = $region25
    $region24: #{tpu_custom_call.1} parent=1 // pred_region
      _
    $region25: #{tpu_custom_call.1} parent=1 // pred_fallthru
      _
    // Predicated region
    $region26: #{tpu_custom_call.1} parent=1 // pred_check
      _
    $region27: #{tpu_custom_call.1} parent=1 // pred_check_branch
      %71 = sbr.rel (0) target = $region29
    $region28: #{tpu_custom_call.1} parent=1 // pred_region
      %72 = dma.done [#allocation4], 256
    $region29: #{tpu_custom_call.1} parent=1 // pred_fallthru
      _
    // Predicated region
    $region30: #{tpu_custom_call.1} parent=1 // pred_check
      _
    $region31: #{tpu_custom_call.1} parent=1 // pred_check_branch
      %74 = sbr.rel (0) target = $region33
    $region32: #{tpu_custom_call.1} parent=1 // pred_region
      %75 = dma.done [#allocation7], 512
    $region33: #{tpu_custom_call.1} parent=1 // pred_fallthru
      _
    // Predicated region
    $region34: #{tpu_custom_call.1} parent=1 // pred_check
      _
    $region35: #{tpu_custom_call.1} parent=1 // pred_check_branch
      %77 = sbr.rel (0) target = $region37
    $region36: #{tpu_custom_call.1} parent=1 // pred_region
      %78 = dma.done [#allocation7], 512
    $region37: #{tpu_custom_call.1} parent=1 // pred_fallthru
      _
    // Predicated region
    $region38: #{tpu_custom_call.1} parent=1 // pred_check
      _
    $region39: #{tpu_custom_call.1} parent=1 // pred_check_branch
      %80 = sbr.rel (0) target = $region41
    $region40: #{tpu_custom_call.1} parent=1 // pred_region
      %81 = dma.done [#allocation10], 512
    $region41: #{tpu_custom_call.1} parent=1 // pred_fallthru
      _
    %v82 = vld [vmem:[#allocation3] sm:$0xff]
    %v83 = vld [vmem:[#allocation3 + $0x8] sm:$0xff]
    %v84 = vld [vmem:[#allocation6] sm:$0xff]
    %v85 = vld [vmem:[#allocation6 + $0x8] sm:$0xff]
    %v86 = vld [vmem:[#allocation6 + $0x10] sm:$0xff]
    %v87 = vld [vmem:[#allocation6 + $0x18] sm:$0xff]
    %v88 = vld [vmem:[%s3] sm:$0x1]
    %v90 = vlaneseq
    %v91 = vshrl.u32 %v90, 7
    %v92 = vsub.s32 0, %v91
    %v93 = vrot.slane %v88, %v92
    %vm95 = vcmask 261120
    %v97 = vsel %vm95, %v82, 0
    %v100 = vsel %vm95, %v83, 0
    %102 = vmatprep.subr.mxu0 0.0
    %103 = vmatpush1.msra.mxu0 %v84
    %104 = vmatprep.subr.mxu0 0.0
    %105 = vmatpush1.msra.mxu0 %v85
    %106 = vmatprep.subr.mxu0 0.0
    %107 = vmatpush1.msra.mxu0 %v86
    %108 = vmatprep.subr.mxu0 0.0
    %109 = vmatpush1.msra.mxu0 %v87
    %110 = vmatprep.subr.mxu0 0.0
    %111 = vmatpush1.msra.mxu0 0.0
    %112 = vmatprep.subr.mxu0 0.0
    %113 = vmatpush1.msra.mxu0 0.0
    %114 = vmatprep.subr.mxu0 0.0
    %115 = vmatpush1.msra.mxu0 0.0
    %116 = vmatprep.subr.mxu0 0.0
    %117 = vmatpush1.msra.mxu0 0.0
    %118 = vmatprep.subr.mxu0 0.0
    %119 = vmatpush1.msra.mxu0 0.0
    %120 = vmatprep.subr.mxu0 0.0
    %121 = vmatpush1.msra.mxu0 0.0
    %122 = vmatprep.subr.mxu0 0.0
    %123 = vmatpush1.msra.mxu0 0.0
    %124 = vmatprep.subr.mxu0 0.0
    %125 = vmatpush1.msra.mxu0 0.0
    %126 = vmatprep.subr.mxu0 0.0
    %127 = vmatpush1.msra.mxu0 0.0
    %128 = vmatprep.subr.mxu0 0.0
    %129 = vmatpush1.msra.mxu0 0.0
    %130 = vmatprep.subr.mxu0 0.0
    %131 = vmatpush1.msra.mxu0 0.0
    %132 = vmatprep.subr.mxu0 0.0
    %133 = vmatpush1.msra.mxu0 0.0
    %134 = vmatprep.subr.mxu0 0.0
    %135 = vmatpush1.msra.mxu0 0.0
    %136 = vmatprep.subr.mxu0 0.0
    %137 = vmatpush1.msra.mxu0 0.0
    %138 = vmatprep.subr.mxu0 0.0
    %139 = vmatpush1.msra.mxu0 0.0
    %140 = vmatprep.subr.mxu0 0.0
    %141 = vmatpush1.msra.mxu0 0.0
    %142 = vmatprep.subr.mxu0 0.0
    %143 = vmatpush1.msra.mxu0 0.0
    %144 = vmatprep.subr.mxu0 0.0
    %145 = vmatpush1.msra.mxu0 0.0
    %146 = vmatprep.subr.mxu0 0.0
    %147 = vmatpush1.msra.mxu0 0.0
    %148 = vmatprep.subr.mxu0 0.0
    %149 = vmatpush1.msra.mxu0 0.0
    %150 = vmatprep.subr.mxu0 0.0
    %151 = vmatpush1.msra.mxu0 0.0
    %152 = vmatprep.subr.mxu0 0.0
    %153 = vmatpush1.msra.mxu0 0.0
    %154 = vmatprep.subr.mxu0 0.0
    %155 = vmatpush1.msra.mxu0 0.0
    %156 = vmatprep.subr.mxu0 0.0
    %157 = vmatpush1.msra.mxu0 0.0
    %158 = vmatprep.subr.mxu0 0.0
    %159 = vmatpush1.msra.mxu0 0.0
    %160 = vmatprep.subr.mxu0 0.0
    %161 = vmatpush1.msra.mxu0 0.0
    %162 = vmatprep.subr.mxu0 0.0
    %163 = vmatpush1.msra.mxu0 0.0
    %164 = vmatprep.subr.mxu0 0.0
    %165 = vmatpush1.msra.mxu0 0.0
    %166 = vmatprep.mubr.f32.mxu0 0.0
    %167 = vmatmul.mubr.f32.gmra.mrb[0].mxu0 %v97
    %v168 = vpop.f32.mrb[0].mxu0
    %v169 = vadd.f32 %v93, %v168
    %v170 = vpop.f32.mrb[0].mxu0
    %171 = vmatprep.mubr.f32.mxu0 0.0
    %172 = vmatmul.mubr.f32.gmra.mrb[0].mxu0 %v100
    %v173 = vpop.f32.mrb[0].mxu0
    %v174 = vadd.f32 %v93, %v173
    %v175 = vpop.f32.mrb[0].mxu0
    %176 = vdwg.mxu0
    %v177 = vld [vmem:[#allocation8] sm:$0xff]
    %v178 = vld [vmem:[#allocation8 + $0x8] sm:$0xff]
    %v179 = vld [vmem:[#allocation8 + $0x10] sm:$0xff]
    %v180 = vld [vmem:[#allocation8 + $0x18] sm:$0xff]
    %v182 = vsel %vm95, 0.0, 0
    %184 = vmatprep.subr.mxu0 0.0
    %185 = vmatpush1.msra.mxu0 %v177
    %186 = vmatprep.subr.mxu0 0.0
    %187 = vmatpush1.msra.mxu0 %v178
    %188 = vmatprep.subr.mxu0 0.0
    %189 = vmatpush1.msra.mxu0 %v179
    %190 = vmatprep.subr.mxu0 0.0
    %191 = vmatpush1.msra.mxu0 %v180
    %192 = vmatprep.subr.mxu0 0.0
    %193 = vmatpush1.msra.mxu0 0.0
    %194 = vmatprep.subr.mxu0 0.0
    %195 = vmatpush1.msra.mxu0 0.0
    %196 = vmatprep.subr.mxu0 0.0
    %197 = vmatpush1.msra.mxu0 0.0
    %198 = vmatprep.subr.mxu0 0.0
    %199 = vmatpush1.msra.mxu0 0.0
    %200 = vmatprep.subr.mxu0 0.0
    %201 = vmatpush1.msra.mxu0 0.0
    %202 = vmatprep.subr.mxu0 0.0
    %203 = vmatpush1.msra.mxu0 0.0
    %204 = vmatprep.subr.mxu0 0.0
    %205 = vmatpush1.msra.mxu0 0.0
    %206 = vmatprep.subr.mxu0 0.0
    %207 = vmatpush1.msra.mxu0 0.0
    %208 = vmatprep.subr.mxu0 0.0
    %209 = vmatpush1.msra.mxu0 0.0
    %210 = vmatprep.subr.mxu0 0.0
    %211 = vmatpush1.msra.mxu0 0.0
    %212 = vmatprep.subr.mxu0 0.0
    %213 = vmatpush1.msra.mxu0 0.0
    %214 = vmatprep.subr.mxu0 0.0
    %215 = vmatpush1.msra.mxu0 0.0
    %216 = vmatprep.subr.mxu0 0.0
    %217 = vmatpush1.msra.mxu0 0.0
    %218 = vmatprep.subr.mxu0 0.0
    %219 = vmatpush1.msra.mxu0 0.0
    %220 = vmatprep.subr.mxu0 0.0
    %221 = vmatpush1.msra.mxu0 0.0
    %222 = vmatprep.subr.mxu0 0.0
    %223 = vmatpush1.msra.mxu0 0.0
    %224 = vmatprep.subr.mxu0 0.0
    %225 = vmatpush1.msra.mxu0 0.0
    %226 = vmatprep.subr.mxu0 0.0
    %227 = vmatpush1.msra.mxu0 0.0
    %228 = vmatprep.subr.mxu0 0.0
    %229 = vmatpush1.msra.mxu0 0.0
    %230 = vmatprep.subr.mxu0 0.0
    %231 = vmatpush1.msra.mxu0 0.0
    %232 = vmatprep.subr.mxu0 0.0
    %233 = vmatpush1.msra.mxu0 0.0
    %234 = vmatprep.subr.mxu0 0.0
    %235 = vmatpush1.msra.mxu0 0.0
    %236 = vmatprep.subr.mxu0 0.0
    %237 = vmatpush1.msra.mxu0 0.0
    %238 = vmatprep.subr.mxu0 0.0
    %239 = vmatpush1.msra.mxu0 0.0
    %240 = vmatprep.subr.mxu0 0.0
    %241 = vmatpush1.msra.mxu0 0.0
    %242 = vmatprep.subr.mxu0 0.0
    %243 = vmatpush1.msra.mxu0 0.0
    %244 = vmatprep.subr.mxu0 0.0
    %245 = vmatpush1.msra.mxu0 0.0
    %246 = vmatprep.subr.mxu0 0.0
    %247 = vmatpush1.msra.mxu0 0.0
    %248 = vmatprep.mubr.f32.mxu0 0.0
    %249 = vmatmul.mubr.f32.gmra.mrb[0].mxu0 %v182
    %v250 = vpop.f32.mrb[0].mxu0
    %v251 = vadd.f32 0.0, %v250
    %v252 = vpop.f32.mrb[0].mxu0
    %253 = vdwg.mxu0
    %v254 = vadd.f32 %v169, %v251
    %v255 = vmax.f32 %v254, 0.0
    %vm256 = vcmask 254976
    %257 = vst.msk [vmem:[#allocation2] sm:$0x3] %vm256, %v255
    %v259 = vsel %vm95, %v255, 0
    %261 = vmatprep.subr.mxu0 0.0
    %262 = vmatpush1.msra.mxu0 %v177
    %263 = vmatprep.subr.mxu0 0.0
    %264 = vmatpush1.msra.mxu0 %v178
    %265 = vmatprep.subr.mxu0 0.0
    %266 = vmatpush1.msra.mxu0 %v179
    %267 = vmatprep.subr.mxu0 0.0
    %268 = vmatpush1.msra.mxu0 %v180
    %269 = vmatprep.subr.mxu0 0.0
    %270 = vmatpush1.msra.mxu0 0.0
    %271 = vmatprep.subr.mxu0 0.0
    %272 = vmatpush1.msra.mxu0 0.0
    %273 = vmatprep.subr.mxu0 0.0
    %274 = vmatpush1.msra.mxu0 0.0
    %275 = vmatprep.subr.mxu0 0.0
    %276 = vmatpush1.msra.mxu0 0.0
    %277 = vmatprep.subr.mxu0 0.0
    %278 = vmatpush1.msra.mxu0 0.0
    %279 = vmatprep.subr.mxu0 0.0
    %280 = vmatpush1.msra.mxu0 0.0
    %281 = vmatprep.subr.mxu0 0.0
    %282 = vmatpush1.msra.mxu0 0.0
    %283 = vmatprep.subr.mxu0 0.0
    %284 = vmatpush1.msra.mxu0 0.0
    %285 = vmatprep.subr.mxu0 0.0
    %286 = vmatpush1.msra.mxu0 0.0
    %287 = vmatprep.subr.mxu0 0.0
    %288 = vmatpush1.msra.mxu0 0.0
    %289 = vmatprep.subr.mxu0 0.0
    %290 = vmatpush1.msra.mxu0 0.0
    %291 = vmatprep.subr.mxu0 0.0
    %292 = vmatpush1.msra.mxu0 0.0
    %293 = vmatprep.subr.mxu0 0.0
    %294 = vmatpush1.msra.mxu0 0.0
    %295 = vmatprep.subr.mxu0 0.0
    %296 = vmatpush1.msra.mxu0 0.0
    %297 = vmatprep.subr.mxu0 0.0
    %298 = vmatpush1.msra.mxu0 0.0
    %299 = vmatprep.subr.mxu0 0.0
    %300 = vmatpush1.msra.mxu0 0.0
    %301 = vmatprep.subr.mxu0 0.0
    %302 = vmatpush1.msra.mxu0 0.0
    %303 = vmatprep.subr.mxu0 0.0
    %304 = vmatpush1.msra.mxu0 0.0
    %305 = vmatprep.subr.mxu0 0.0
    %306 = vmatpush1.msra.mxu0 0.0
    %307 = vmatprep.subr.mxu0 0.0
    %308 = vmatpush1.msra.mxu0 0.0
    %309 = vmatprep.subr.mxu0 0.0
    %310 = vmatpush1.msra.mxu0 0.0
    %311 = vmatprep.subr.mxu0 0.0
    %312 = vmatpush1.msra.mxu0 0.0
    %313 = vmatprep.subr.mxu0 0.0
    %314 = vmatpush1.msra.mxu0 0.0
    %315 = vmatprep.subr.mxu0 0.0
    %316 = vmatpush1.msra.mxu0 0.0
    %317 = vmatprep.subr.mxu0 0.0
    %318 = vmatpush1.msra.mxu0 0.0
    %319 = vmatprep.subr.mxu0 0.0
    %320 = vmatpush1.msra.mxu0 0.0
    %321 = vmatprep.subr.mxu0 0.0
    %322 = vmatpush1.msra.mxu0 0.0
    %323 = vmatprep.subr.mxu0 0.0
    %324 = vmatpush1.msra.mxu0 0.0
    %325 = vmatprep.mubr.f32.mxu0 0.0
    %326 = vmatmul.mubr.f32.gmra.mrb[0].mxu0 %v259
    %v327 = vpop.f32.mrb[0].mxu0
    %v328 = vadd.f32 0.0, %v327
    %v329 = vpop.f32.mrb[0].mxu0
    %330 = vdwg.mxu0
    %v332 = vrot.slane %v328, 6
    %v334 = vadd.f32 %v169, %v332
    %v335 = vmax.f32 %v334, 0.0
    %vm336 = vcmask 257026
    %337 = vst.msk [vmem:[#allocation2] sm:$0xc] %vm336, %v335
    %v339 = vrot.slane %v335, 2
    %v340 = vsel %vm95, %v339, 0
    %342 = vmatprep.subr.mxu0 0.0
    %343 = vmatpush1.msra.mxu0 %v177
    %344 = vmatprep.subr.mxu0 0.0
    %345 = vmatpush1.msra.mxu0 %v178
    %346 = vmatprep.subr.mxu0 0.0
    %347 = vmatpush1.msra.mxu0 %v179
    %348 = vmatprep.subr.mxu0 0.0
    %349 = vmatpush1.msra.mxu0 %v180
    %350 = vmatprep.subr.mxu0 0.0
    %351 = vmatpush1.msra.mxu0 0.0
    %352 = vmatprep.subr.mxu0 0.0
    %353 = vmatpush1.msra.mxu0 0.0
    %354 = vmatprep.subr.mxu0 0.0
    %355 = vmatpush1.msra.mxu0 0.0
    %356 = vmatprep.subr.mxu0 0.0
    %357 = vmatpush1.msra.mxu0 0.0
    %358 = vmatprep.subr.mxu0 0.0
    %359 = vmatpush1.msra.mxu0 0.0
    %360 = vmatprep.subr.mxu0 0.0
    %361 = vmatpush1.msra.mxu0 0.0
    %362 = vmatprep.subr.mxu0 0.0
    %363 = vmatpush1.msra.mxu0 0.0
    %364 = vmatprep.subr.mxu0 0.0
    %365 = vmatpush1.msra.mxu0 0.0
    %366 = vmatprep.subr.mxu0 0.0
    %367 = vmatpush1.msra.mxu0 0.0
    %368 = vmatprep.subr.mxu0 0.0
    %369 = vmatpush1.msra.mxu0 0.0
    %370 = vmatprep.subr.mxu0 0.0
    %371 = vmatpush1.msra.mxu0 0.0
    %372 = vmatprep.subr.mxu0 0.0
    %373 = vmatpush1.msra.mxu0 0.0
    %374 = vmatprep.subr.mxu0 0.0
    %375 = vmatpush1.msra.mxu0 0.0
    %376 = vmatprep.subr.mxu0 0.0
    %377 = vmatpush1.msra.mxu0 0.0
    %378 = vmatprep.subr.mxu0 0.0
    %379 = vmatpush1.msra.mxu0 0.0
    %380 = vmatprep.subr.mxu0 0.0
    %381 = vmatpush1.msra.mxu0 0.0
    %382 = vmatprep.subr.mxu0 0.0
    %383 = vmatpush1.msra.mxu0 0.0
    %384 = vmatprep.subr.mxu0 0.0
    %385 = vmatpush1.msra.mxu0 0.0
    %386 = vmatprep.subr.mxu0 0.0
    %387 = vmatpush1.msra.mxu0 0.0
    %388 = vmatprep.subr.mxu0 0.0
    %389 = vmatpush1.msra.mxu0 0.0
    %390 = vmatprep.subr.mxu0 0.0
    %391 = vmatpush1.msra.mxu0 0.0
    %392 = vmatprep.subr.mxu0 0.0
    %393 = vmatpush1.msra.mxu0 0.0
    %394 = vmatprep.subr.mxu0 0.0
    %395 = vmatpush1.msra.mxu0 0.0
    %396 = vmatprep.subr.mxu0 0.0
    %397 = vmatpush1.msra.mxu0 0.0
    %398 = vmatprep.subr.mxu0 0.0
    %399 = vmatpush1.msra.mxu0 0.0
    %400 = vmatprep.subr.mxu0 0.0
    %401 = vmatpush1.msra.mxu0 0.0
    %402 = vmatprep.subr.mxu0 0.0
    %403 = vmatpush1.msra.mxu0 0.0
    %404 = vmatprep.subr.mxu0 0.0
    %405 = vmatpush1.msra.mxu0 0.0
    %406 = vmatprep.mubr.f32.mxu0 0.0
    %407 = vmatmul.mubr.f32.gmra.mrb[0].mxu0 %v340
    %v408 = vpop.f32.mrb[0].mxu0
    %v409 = vadd.f32 0.0, %v408
    %v410 = vpop.f32.mrb[0].mxu0
    %411 = vdwg.mxu0
    %v413 = vrot.slane %v409, 4
    %v415 = vadd.f32 %v169, %v413
    %v416 = vmax.f32 %v415, 0.0
    %vm417 = vcmask 259076
    %418 = vst.msk [vmem:[#allocation2] sm:$0x30] %vm417, %v416
    %v420 = vrot.slane %v416, 4
    %v421 = vsel %vm95, %v420, 0
    %423 = vmatprep.subr.mxu0 0.0
    %424 = vmatpush1.msra.mxu0 %v177
    %425 = vmatprep.subr.mxu0 0.0
    %426 = vmatpush1.msra.mxu0 %v178
    %427 = vmatprep.subr.mxu0 0.0
    %428 = vmatpush1.msra.mxu0 %v179
    %429 = vmatprep.subr.mxu0 0.0
    %430 = vmatpush1.msra.mxu0 %v180
    %431 = vmatprep.subr.mxu0 0.0
    %432 = vmatpush1.msra.mxu0 0.0
    %433 = vmatprep.subr.mxu0 0.0
    %434 = vmatpush1.msra.mxu0 0.0
    %435 = vmatprep.subr.mxu0 0.0
    %436 = vmatpush1.msra.mxu0 0.0
    %437 = vmatprep.subr.mxu0 0.0
    %438 = vmatpush1.msra.mxu0 0.0
    %439 = vmatprep.subr.mxu0 0.0
    %440 = vmatpush1.msra.mxu0 0.0
    %441 = vmatprep.subr.mxu0 0.0
    %442 = vmatpush1.msra.mxu0 0.0
    %443 = vmatprep.subr.mxu0 0.0
    %444 = vmatpush1.msra.mxu0 0.0
    %445 = vmatprep.subr.mxu0 0.0
    %446 = vmatpush1.msra.mxu0 0.0
    %447 = vmatprep.subr.mxu0 0.0
    %448 = vmatpush1.msra.mxu0 0.0
    %449 = vmatprep.subr.mxu0 0.0
    %450 = vmatpush1.msra.mxu0 0.0
    %451 = vmatprep.subr.mxu0 0.0
    %452 = vmatpush1.msra.mxu0 0.0
    %453 = vmatprep.subr.mxu0 0.0
    %454 = vmatpush1.msra.mxu0 0.0
    %455 = vmatprep.subr.mxu0 0.0
    %456 = vmatpush1.msra.mxu0 0.0
    %457 = vmatprep.subr.mxu0 0.0
    %458 = vmatpush1.msra.mxu0 0.0
    %459 = vmatprep.subr.mxu0 0.0
    %460 = vmatpush1.msra.mxu0 0.0
    %461 = vmatprep.subr.mxu0 0.0
    %462 = vmatpush1.msra.mxu0 0.0
    %463 = vmatprep.subr.mxu0 0.0
    %464 = vmatpush1.msra.mxu0 0.0
    %465 = vmatprep.subr.mxu0 0.0
    %466 = vmatpush1.msra.mxu0 0.0
    %467 = vmatprep.subr.mxu0 0.0
    %468 = vmatpush1.msra.mxu0 0.0
    %469 = vmatprep.subr.mxu0 0.0
    %470 = vmatpush1.msra.mxu0 0.0
    %471 = vmatprep.subr.mxu0 0.0
    %472 = vmatpush1.msra.mxu0 0.0
    %473 = vmatprep.subr.mxu0 0.0
    %474 = vmatpush1.msra.mxu0 0.0
    %475 = vmatprep.subr.mxu0 0.0
    %476 = vmatpush1.msra.mxu0 0.0
    %477 = vmatprep.subr.mxu0 0.0
    %478 = vmatpush1.msra.mxu0 0.0
    %479 = vmatprep.subr.mxu0 0.0
    %480 = vmatpush1.msra.mxu0 0.0
    %481 = vmatprep.subr.mxu0 0.0
    %482 = vmatpush1.msra.mxu0 0.0
    %483 = vmatprep.subr.mxu0 0.0
    %484 = vmatpush1.msra.mxu0 0.0
    %485 = vmatprep.subr.mxu0 0.0
    %486 = vmatpush1.msra.mxu0 0.0
    %487 = vmatprep.mubr.f32.mxu0 0.0
    %488 = vmatmul.mubr.f32.gmra.mrb[0].mxu0 %v421
    %v489 = vpop.f32.mrb[0].mxu0
    %v490 = vadd.f32 0.0, %v489
    %v491 = vpop.f32.mrb[0].mxu0
    %492 = vdwg.mxu0
    %v494 = vrot.slane %v490, 2
    %v496 = vadd.f32 %v169, %v494
    %v497 = vmax.f32 %v496, 0.0
    %vm498 = vcmask 261126
    %499 = vst.msk [vmem:[#allocation2] sm:$0xc0] %vm498, %v497
    %v501 = vrot.slane %v497, 6
    %v502 = vsel %vm95, %v501, 0
    %504 = vmatprep.subr.mxu0 0.0
    %505 = vmatpush1.msra.mxu0 %v177
    %506 = vmatprep.subr.mxu0 0.0
    %507 = vmatpush1.msra.mxu0 %v178
    %508 = vmatprep.subr.mxu0 0.0
    %509 = vmatpush1.msra.mxu0 %v179
    %510 = vmatprep.subr.mxu0 0.0
    %511 = vmatpush1.msra.mxu0 %v180
    %512 = vmatprep.subr.mxu0 0.0
    %513 = vmatpush1.msra.mxu0 0.0
    %514 = vmatprep.subr.mxu0 0.0
    %515 = vmatpush1.msra.mxu0 0.0
    %516 = vmatprep.subr.mxu0 0.0
    %517 = vmatpush1.msra.mxu0 0.0
    %518 = vmatprep.subr.mxu0 0.0
    %519 = vmatpush1.msra.mxu0 0.0
    %520 = vmatprep.subr.mxu0 0.0
    %521 = vmatpush1.msra.mxu0 0.0
    %522 = vmatprep.subr.mxu0 0.0
    %523 = vmatpush1.msra.mxu0 0.0
    %524 = vmatprep.subr.mxu0 0.0
    %525 = vmatpush1.msra.mxu0 0.0
    %526 = vmatprep.subr.mxu0 0.0
    %527 = vmatpush1.msra.mxu0 0.0
    %528 = vmatprep.subr.mxu0 0.0
    %529 = vmatpush1.msra.mxu0 0.0
    %530 = vmatprep.subr.mxu0 0.0
    %531 = vmatpush1.msra.mxu0 0.0
    %532 = vmatprep.subr.mxu0 0.0
    %533 = vmatpush1.msra.mxu0 0.0
    %534 = vmatprep.subr.mxu0 0.0
    %535 = vmatpush1.msra.mxu0 0.0
    %536 = vmatprep.subr.mxu0 0.0
    %537 = vmatpush1.msra.mxu0 0.0
    %538 = vmatprep.subr.mxu0 0.0
    %539 = vmatpush1.msra.mxu0 0.0
    %540 = vmatprep.subr.mxu0 0.0
    %541 = vmatpush1.msra.mxu0 0.0
    %542 = vmatprep.subr.mxu0 0.0
    %543 = vmatpush1.msra.mxu0 0.0
    %544 = vmatprep.subr.mxu0 0.0
    %545 = vmatpush1.msra.mxu0 0.0
    %546 = vmatprep.subr.mxu0 0.0
    %547 = vmatpush1.msra.mxu0 0.0
    %548 = vmatprep.subr.mxu0 0.0
    %549 = vmatpush1.msra.mxu0 0.0
    %550 = vmatprep.subr.mxu0 0.0
    %551 = vmatpush1.msra.mxu0 0.0
    %552 = vmatprep.subr.mxu0 0.0
    %553 = vmatpush1.msra.mxu0 0.0
    %554 = vmatprep.subr.mxu0 0.0
    %555 = vmatpush1.msra.mxu0 0.0
    %556 = vmatprep.subr.mxu0 0.0
    %557 = vmatpush1.msra.mxu0 0.0
    %558 = vmatprep.subr.mxu0 0.0
    %559 = vmatpush1.msra.mxu0 0.0
    %560 = vmatprep.subr.mxu0 0.0
    %561 = vmatpush1.msra.mxu0 0.0
    %562 = vmatprep.subr.mxu0 0.0
    %563 = vmatpush1.msra.mxu0 0.0
    %564 = vmatprep.subr.mxu0 0.0
    %565 = vmatpush1.msra.mxu0 0.0
    %566 = vmatprep.subr.mxu0 0.0
    %567 = vmatpush1.msra.mxu0 0.0
    %568 = vmatprep.mubr.f32.mxu0 0.0
    %569 = vmatmul.mubr.f32.gmra.mrb[0].mxu0 %v502
    %v570 = vpop.f32.mrb[0].mxu0
    %v571 = vadd.f32 0.0, %v570
    %v572 = vpop.f32.mrb[0].mxu0
    %573 = vdwg.mxu0
    %v574 = vadd.f32 %v174, %v571
    %v575 = vmax.f32 %v574, 0.0
    %576 = vst.msk [vmem:[#allocation2 + $0x8] sm:$0x3] %vm256, %v575
    %v578 = vsel %vm95, %v575, 0
    %580 = vmatprep.subr.mxu0 0.0
    %581 = vmatpush1.msra.mxu0 %v177
    %582 = vmatprep.subr.mxu0 0.0
    %583 = vmatpush1.msra.mxu0 %v178
    %584 = vmatprep.subr.mxu0 0.0
    %585 = vmatpush1.msra.mxu0 %v179
    %586 = vmatprep.subr.mxu0 0.0
    %587 = vmatpush1.msra.mxu0 %v180
    %588 = vmatprep.subr.mxu0 0.0
    %589 = vmatpush1.msra.mxu0 0.0
    %590 = vmatprep.subr.mxu0 0.0
    %591 = vmatpush1.msra.mxu0 0.0
    %592 = vmatprep.subr.mxu0 0.0
    %593 = vmatpush1.msra.mxu0 0.0
    %594 = vmatprep.subr.mxu0 0.0
    %595 = vmatpush1.msra.mxu0 0.0
    %596 = vmatprep.subr.mxu0 0.0
    %597 = vmatpush1.msra.mxu0 0.0
    %598 = vmatprep.subr.mxu0 0.0
    %599 = vmatpush1.msra.mxu0 0.0
    %600 = vmatprep.subr.mxu0 0.0
    %601 = vmatpush1.msra.mxu0 0.0
    %602 = vmatprep.subr.mxu0 0.0
    %603 = vmatpush1.msra.mxu0 0.0
    %604 = vmatprep.subr.mxu0 0.0
    %605 = vmatpush1.msra.mxu0 0.0
    %606 = vmatprep.subr.mxu0 0.0
    %607 = vmatpush1.msra.mxu0 0.0
    %608 = vmatprep.subr.mxu0 0.0
    %609 = vmatpush1.msra.mxu0 0.0
    %610 = vmatprep.subr.mxu0 0.0
    %611 = vmatpush1.msra.mxu0 0.0
    %612 = vmatprep.subr.mxu0 0.0
    %613 = vmatpush1.msra.mxu0 0.0
    %614 = vmatprep.subr.mxu0 0.0
    %615 = vmatpush1.msra.mxu0 0.0
    %616 = vmatprep.subr.mxu0 0.0
    %617 = vmatpush1.msra.mxu0 0.0
    %618 = vmatprep.subr.mxu0 0.0
    %619 = vmatpush1.msra.mxu0 0.0
    %620 = vmatprep.subr.mxu0 0.0
    %621 = vmatpush1.msra.mxu0 0.0
    %622 = vmatprep.subr.mxu0 0.0
    %623 = vmatpush1.msra.mxu0 0.0
    %624 = vmatprep.subr.mxu0 0.0
    %625 = vmatpush1.msra.mxu0 0.0
    %626 = vmatprep.subr.mxu0 0.0
    %627 = vmatpush1.msra.mxu0 0.0
    %628 = vmatprep.subr.mxu0 0.0
    %629 = vmatpush1.msra.mxu0 0.0
    %630 = vmatprep.subr.mxu0 0.0
    %631 = vmatpush1.msra.mxu0 0.0
    %632 = vmatprep.subr.mxu0 0.0
    %633 = vmatpush1.msra.mxu0 0.0
    %634 = vmatprep.subr.mxu0 0.0
    %635 = vmatpush1.msra.mxu0 0.0
    %636 = vmatprep.subr.mxu0 0.0
    %637 = vmatpush1.msra.mxu0 0.0
    %638 = vmatprep.subr.mxu0 0.0
    %639 = vmatpush1.msra.mxu0 0.0
    %640 = vmatprep.subr.mxu0 0.0
    %641 = vmatpush1.msra.mxu0 0.0
    %642 = vmatprep.subr.mxu0 0.0
    %643 = vmatpush1.msra.mxu0 0.0
    %644 = vmatprep.mubr.f32.mxu0 0.0
    %645 = vmatmul.mubr.f32.gmra.mrb[0].mxu0 %v578
    %v646 = vpop.f32.mrb[0].mxu0
    %v647 = vadd.f32 0.0, %v646
    %v648 = vpop.f32.mrb[0].mxu0
    %649 = vdwg.mxu0
    %v651 = vrot.slane %v647, 6
    %v653 = vadd.f32 %v174, %v651
    %v654 = vmax.f32 %v653, 0.0
    %655 = vst.msk [vmem:[#allocation2 + $0x8] sm:$0xc] %vm336, %v654
    %v657 = vrot.slane %v654, 2
    %v658 = vsel %vm95, %v657, 0
    %660 = vmatprep.subr.mxu0 0.0
    %661 = vmatpush1.msra.mxu0 %v177
    %662 = vmatprep.subr.mxu0 0.0
    %663 = vmatpush1.msra.mxu0 %v178
    %664 = vmatprep.subr.mxu0 0.0
    %665 = vmatpush1.msra.mxu0 %v179
    %666 = vmatprep.subr.mxu0 0.0
    %667 = vmatpush1.msra.mxu0 %v180
    %668 = vmatprep.subr.mxu0 0.0
    %669 = vmatpush1.msra.mxu0 0.0
    %670 = vmatprep.subr.mxu0 0.0
    %671 = vmatpush1.msra.mxu0 0.0
    %672 = vmatprep.subr.mxu0 0.0
    %673 = vmatpush1.msra.mxu0 0.0
    %674 = vmatprep.subr.mxu0 0.0
    %675 = vmatpush1.msra.mxu0 0.0
    %676 = vmatprep.subr.mxu0 0.0
    %677 = vmatpush1.msra.mxu0 0.0
    %678 = vmatprep.subr.mxu0 0.0
    %679 = vmatpush1.msra.mxu0 0.0
    %680 = vmatprep.subr.mxu0 0.0
    %681 = vmatpush1.msra.mxu0 0.0
    %682 = vmatprep.subr.mxu0 0.0
    %683 = vmatpush1.msra.mxu0 0.0
    %684 = vmatprep.subr.mxu0 0.0
    %685 = vmatpush1.msra.mxu0 0.0
    %686 = vmatprep.subr.mxu0 0.0
    %687 = vmatpush1.msra.mxu0 0.0
    %688 = vmatprep.subr.mxu0 0.0
    %689 = vmatpush1.msra.mxu0 0.0
    %690 = vmatprep.subr.mxu0 0.0
    %691 = vmatpush1.msra.mxu0 0.0
    %692 = vmatprep.subr.mxu0 0.0
    %693 = vmatpush1.msra.mxu0 0.0
    %694 = vmatprep.subr.mxu0 0.0
    %695 = vmatpush1.msra.mxu0 0.0
    %696 = vmatprep.subr.mxu0 0.0
    %697 = vmatpush1.msra.mxu0 0.0
    %698 = vmatprep.subr.mxu0 0.0
    %699 = vmatpush1.msra.mxu0 0.0
    %700 = vmatprep.subr.mxu0 0.0
    %701 = vmatpush1.msra.mxu0 0.0
    %702 = vmatprep.subr.mxu0 0.0
    %703 = vmatpush1.msra.mxu0 0.0
    %704 = vmatprep.subr.mxu0 0.0
    %705 = vmatpush1.msra.mxu0 0.0
    %706 = vmatprep.subr.mxu0 0.0
    %707 = vmatpush1.msra.mxu0 0.0
    %708 = vmatprep.subr.mxu0 0.0
    %709 = vmatpush1.msra.mxu0 0.0
    %710 = vmatprep.subr.mxu0 0.0
    %711 = vmatpush1.msra.mxu0 0.0
    %712 = vmatprep.subr.mxu0 0.0
    %713 = vmatpush1.msra.mxu0 0.0
    %714 = vmatprep.subr.mxu0 0.0
    %715 = vmatpush1.msra.mxu0 0.0
    %716 = vmatprep.subr.mxu0 0.0
    %717 = vmatpush1.msra.mxu0 0.0
    %718 = vmatprep.subr.mxu0 0.0
    %719 = vmatpush1.msra.mxu0 0.0
    %720 = vmatprep.subr.mxu0 0.0
    %721 = vmatpush1.msra.mxu0 0.0
    %722 = vmatprep.subr.mxu0 0.0
    %723 = vmatpush1.msra.mxu0 0.0
    %724 = vmatprep.mubr.f32.mxu0 0.0
    %725 = vmatmul.mubr.f32.gmra.mrb[0].mxu0 %v658
    %v726 = vpop.f32.mrb[0].mxu0
    %v727 = vadd.f32 0.0, %v726
    %v728 = vpop.f32.mrb[0].mxu0
    %729 = vdwg.mxu0
    %v731 = vrot.slane %v727, 4
    %v733 = vadd.f32 %v174, %v731
    %v734 = vmax.f32 %v733, 0.0
    %735 = vst.msk [vmem:[#allocation2 + $0x8] sm:$0x30] %vm417, %v734
    %v737 = vrot.slane %v734, 4
    %v738 = vsel %vm95, %v737, 0
    %740 = vmatprep.subr.mxu0 0.0
    %741 = vmatpush1.msra.mxu0 %v177
    %742 = vmatprep.subr.mxu0 0.0
    %743 = vmatpush1.msra.mxu0 %v178
    %744 = vmatprep.subr.mxu0 0.0
    %745 = vmatpush1.msra.mxu0 %v179
    %746 = vmatprep.subr.mxu0 0.0
    %747 = vmatpush1.msra.mxu0 %v180
    %748 = vmatprep.subr.mxu0 0.0
    %749 = vmatpush1.msra.mxu0 0.0
    %750 = vmatprep.subr.mxu0 0.0
    %751 = vmatpush1.msra.mxu0 0.0
    %752 = vmatprep.subr.mxu0 0.0
    %753 = vmatpush1.msra.mxu0 0.0
    %754 = vmatprep.subr.mxu0 0.0
    %755 = vmatpush1.msra.mxu0 0.0
    %756 = vmatprep.subr.mxu0 0.0
    %757 = vmatpush1.msra.mxu0 0.0
    %758 = vmatprep.subr.mxu0 0.0
    %759 = vmatpush1.msra.mxu0 0.0
    %760 = vmatprep.subr.mxu0 0.0
    %761 = vmatpush1.msra.mxu0 0.0
    %762 = vmatprep.subr.mxu0 0.0
    %763 = vmatpush1.msra.mxu0 0.0
    %764 = vmatprep.subr.mxu0 0.0
    %765 = vmatpush1.msra.mxu0 0.0
    %766 = vmatprep.subr.mxu0 0.0
    %767 = vmatpush1.msra.mxu0 0.0
    %768 = vmatprep.subr.mxu0 0.0
    %769 = vmatpush1.msra.mxu0 0.0
    %770 = vmatprep.subr.mxu0 0.0
    %771 = vmatpush1.msra.mxu0 0.0
    %772 = vmatprep.subr.mxu0 0.0
    %773 = vmatpush1.msra.mxu0 0.0
    %774 = vmatprep.subr.mxu0 0.0
    %775 = vmatpush1.msra.mxu0 0.0
    %776 = vmatprep.subr.mxu0 0.0
    %777 = vmatpush1.msra.mxu0 0.0
    %778 = vmatprep.subr.mxu0 0.0
    %779 = vmatpush1.msra.mxu0 0.0
    %780 = vmatprep.subr.mxu0 0.0
    %781 = vmatpush1.msra.mxu0 0.0
    %782 = vmatprep.subr.mxu0 0.0
    %783 = vmatpush1.msra.mxu0 0.0
    %784 = vmatprep.subr.mxu0 0.0
    %785 = vmatpush1.msra.mxu0 0.0
    %786 = vmatprep.subr.mxu0 0.0
    %787 = vmatpush1.msra.mxu0 0.0
    %788 = vmatprep.subr.mxu0 0.0
    %789 = vmatpush1.msra.mxu0 0.0
    %790 = vmatprep.subr.mxu0 0.0
    %791 = vmatpush1.msra.mxu0 0.0
    %792 = vmatprep.subr.mxu0 0.0
    %793 = vmatpush1.msra.mxu0 0.0
    %794 = vmatprep.subr.mxu0 0.0
    %795 = vmatpush1.msra.mxu0 0.0
    %796 = vmatprep.subr.mxu0 0.0
    %797 = vmatpush1.msra.mxu0 0.0
    %798 = vmatprep.subr.mxu0 0.0
    %799 = vmatpush1.msra.mxu0 0.0
    %800 = vmatprep.subr.mxu0 0.0
    %801 = vmatpush1.msra.mxu0 0.0
    %802 = vmatprep.subr.mxu0 0.0
    %803 = vmatpush1.msra.mxu0 0.0
    %804 = vmatprep.mubr.f32.mxu0 0.0
    %805 = vmatmul.mubr.f32.gmra.mrb[0].mxu0 %v738
    %v806 = vpop.f32.mrb[0].mxu0
    %v807 = vadd.f32 0.0, %v806
    %v808 = vpop.f32.mrb[0].mxu0
    %809 = vdwg.mxu0
    %v811 = vrot.slane %v807, 2
    %v813 = vadd.f32 %v174, %v811
    %v814 = vmax.f32 %v813, 0.0
    %815 = vst.msk [vmem:[#allocation2 + $0x8] sm:$0xc0] %vm498, %v814
    %816 = vst.msk [vmem:[#allocation12 - $0x6] sm:$0xc0] %vm498, %v814
    %v817 = vld [vmem:[#allocation2] sm:$0xff]
    %v818 = vld [vmem:[#allocation2 + $0x8] sm:$0xff]
    %v819 = vld [vmem:[#allocation9] sm:$0xff]
    %v820 = vld [vmem:[#allocation9 + $0x8] sm:$0xff]
    %v821 = vld [vmem:[#allocation9 + $0x10] sm:$0xff]
    %v822 = vld [vmem:[#allocation9 + $0x18] sm:$0xff]
    %v823 = vld [vmem:[%s5] sm:$0x1]
    %v825 = vlaneseq
    %v826 = vshrl.u32 %v825, 7
    %v827 = vsub.s32 0, %v826
    %v828 = vrot.slane %v823, %v827
    %v831 = vsel %vm95, %v817, 0
    %v834 = vsel %vm95, %v818, 0
    %836 = vmatprep.subr.mxu0 0.0
    %837 = vmatpush1.msra.mxu0 %v819
    %838 = vmatprep.subr.mxu0 0.0
    %839 = vmatpush1.msra.mxu0 %v820
    %840 = vmatprep.subr.mxu0 0.0
    %841 = vmatpush1.msra.mxu0 %v821
    %842 = vmatprep.subr.mxu0 0.0
    %843 = vmatpush1.msra.mxu0 %v822
    %844 = vmatprep.subr.mxu0 0.0
    %845 = vmatpush1.msra.mxu0 0.0
    %846 = vmatprep.subr.mxu0 0.0
    %847 = vmatpush1.msra.mxu0 0.0
    %848 = vmatprep.subr.mxu0 0.0
    %849 = vmatpush1.msra.mxu0 0.0
    %850 = vmatprep.subr.mxu0 0.0
    %851 = vmatpush1.msra.mxu0 0.0
    %852 = vmatprep.subr.mxu0 0.0
    %853 = vmatpush1.msra.mxu0 0.0
    %854 = vmatprep.subr.mxu0 0.0
    %855 = vmatpush1.msra.mxu0 0.0
    %856 = vmatprep.subr.mxu0 0.0
    %857 = vmatpush1.msra.mxu0 0.0
    %858 = vmatprep.subr.mxu0 0.0
    %859 = vmatpush1.msra.mxu0 0.0
    %860 = vmatprep.subr.mxu0 0.0
    %861 = vmatpush1.msra.mxu0 0.0
    %862 = vmatprep.subr.mxu0 0.0
    %863 = vmatpush1.msra.mxu0 0.0
    %864 = vmatprep.subr.mxu0 0.0
    %865 = vmatpush1.msra.mxu0 0.0
    %866 = vmatprep.subr.mxu0 0.0
    %867 = vmatpush1.msra.mxu0 0.0
    %868 = vmatprep.subr.mxu0 0.0
    %869 = vmatpush1.msra.mxu0 0.0
    %870 = vmatprep.subr.mxu0 0.0
    %871 = vmatpush1.msra.mxu0 0.0
    %872 = vmatprep.subr.mxu0 0.0
    %873 = vmatpush1.msra.mxu0 0.0
    %874 = vmatprep.subr.mxu0 0.0
    %875 = vmatpush1.msra.mxu0 0.0
    %876 = vmatprep.subr.mxu0 0.0
    %877 = vmatpush1.msra.mxu0 0.0
    %878 = vmatprep.subr.mxu0 0.0
    %879 = vmatpush1.msra.mxu0 0.0
    %880 = vmatprep.subr.mxu0 0.0
    %881 = vmatpush1.msra.mxu0 0.0
    %882 = vmatprep.subr.mxu0 0.0
    %883 = vmatpush1.msra.mxu0 0.0
    %884 = vmatprep.subr.mxu0 0.0
    %885 = vmatpush1.msra.mxu0 0.0
    %886 = vmatprep.subr.mxu0 0.0
    %887 = vmatpush1.msra.mxu0 0.0
    %888 = vmatprep.subr.mxu0 0.0
    %889 = vmatpush1.msra.mxu0 0.0
    %890 = vmatprep.subr.mxu0 0.0
    %891 = vmatpush1.msra.mxu0 0.0
    %892 = vmatprep.subr.mxu0 0.0
    %893 = vmatpush1.msra.mxu0 0.0
    %894 = vmatprep.subr.mxu0 0.0
    %895 = vmatpush1.msra.mxu0 0.0
    %896 = vmatprep.subr.mxu0 0.0
    %897 = vmatpush1.msra.mxu0 0.0
    %898 = vmatprep.subr.mxu0 0.0
    %899 = vmatpush1.msra.mxu0 0.0
    %900 = vmatprep.mubr.f32.mxu0 0.0
    %901 = vmatmul.mubr.f32.gmra.mrb[0].mxu0 %v831
    %v902 = vpop.f32.mrb[0].mxu0
    %v903 = vadd.f32 %v828, %v902
    %v904 = vpop.f32.mrb[0].mxu0
    %905 = vmatprep.mubr.f32.mxu0 0.0
    %906 = vmatmul.mubr.f32.gmra.mrb[0].mxu0 %v834
    %v907 = vpop.f32.mrb[0].mxu0
    %v908 = vadd.f32 %v828, %v907
    %v909 = vpop.f32.mrb[0].mxu0
    %910 = vdwg.mxu0
    %911 = vst.msk [vmem:[#allocation11] sm:$0xff] %vm95, %v903
    %912 = vst.msk [vmem:[#allocation11 + $0x8] sm:$0xff] %vm95, %v908
    // Predicated region
    $region42: #{tpu_custom_call.1} parent=1 // pred_check
      _
    $region43: #{tpu_custom_call.1} parent=1 // pred_check_branch
      %914 = sbr.rel (0) target = $region45
    $region44: #{tpu_custom_call.1} parent=1 // pred_region
      %s916 = ssub.s32 256, 256
      %917 = vsyncadd [#allocation5], %s916
      %s918 = sshll.u32 [#allocation11], 4
      %s919 = int_to_ptr.vmem [resolvable:$true] %s918
      %924 = dma.vmem_to_hbm [thread:$0]  %s919, 256, %s6, [#allocation5], 128, 128, 8
    $region45: #{tpu_custom_call.1} parent=1 // pred_fallthru
      _
    // Predicated region
    $region46: #{tpu_custom_call.1} parent=1 // pred_check
      _
    $region47: #{tpu_custom_call.1} parent=1 // pred_check_branch
      %926 = sbr.rel (0) target = $region49
    $region48: #{tpu_custom_call.1} parent=1 // pred_region
      %s928 = ssub.s32 32, 32
      %929 = vsyncadd [#allocation13], %s928
      %s931 = sshll.u32 [#allocation12], 4
      %s932 = int_to_ptr.vmem [resolvable:$true] %s931
      %934 = dma.vmem_to_hbm [thread:$0]  %s932, 32, %s7, [#allocation13]
    $region49: #{tpu_custom_call.1} parent=1 // pred_fallthru
      _
    // Predicated region
    $region50: #{tpu_custom_call.1} parent=1 // pred_check
      _
    $region51: #{tpu_custom_call.1} parent=1 // pred_check_branch
      %936 = sbr.rel (0) target = $region53
    $region52: #{tpu_custom_call.1} parent=1 // pred_region
      %937 = dma.done [#allocation5], 256
    $region53: #{tpu_custom_call.1} parent=1 // pred_fallthru
      _
    // Predicated region
    $region54: #{tpu_custom_call.1} parent=1 // pred_check
      _
    $region55: #{tpu_custom_call.1} parent=1 // pred_check_branch
      %939 = sbr.rel (0) target = $region57
    $region56: #{tpu_custom_call.1} parent=1 // pred_region
      %940 = dma.done [#allocation13], 32
    $region57: #{tpu_custom_call.1} parent=1 // pred_fallthru
      _
    %941 = vsyncpa [#allocation4], 1
    %942 = vsyncpa [#allocation7], 1
    %943 = vsyncpa [#allocation10], 1
    %944 = vsyncpa [#allocation5], 1
    %945 = vsyncpa [#allocation13], 1

</llo_original>
